<compile_context>
chip_gen: v5e
topology: v5e:2x2
jax: 0.10.0
libtpu: 0.0.40
codegen_flags: <defaults>
</compile_context>

<pallas_src>
import jax
import jax.numpy as jnp
from jax.experimental import pallas as pl
from jax.experimental.pallas import tpu as pltpu

_LANES = 512       # lane-dense last dim (multiple of 128)
_TILE_ROWS = 1024  # rows per grid step -> (1024, 512) f32 = 2 MiB per block
_MIN_KERNEL_N = _LANES  # below this, plain XLA fusion wins


def _linreg_kernel(wb_ref, x_ref, o_ref):
    # wb_ref: (2,) SMEM scalars [w, b]; x_ref/o_ref: (tile_r, _LANES) VMEM tiles.
    w = wb_ref[0]
    b = wb_ref[1]
    o_ref[...] = x_ref[...] * w + b


def linear_regression(x, weight, bias):
    """x: (N, 1) f32, weight: (1, 1) f32, bias: (1,) f32 -> (N, 1) f32."""
    n = x.shape[0]
    w = weight.reshape(()).astype(jnp.float32)
    b = bias.reshape(()).astype(jnp.float32)

    # Tiny inputs: pallas_call launch overhead dwarfs the work; XLA fuses this free.
    if n < _MIN_KERNEL_N:
        return (x.astype(jnp.float32) * w + b).astype(jnp.float32)

    wb = jnp.stack([w, b])  # packed (2,) SMEM scalars

    # Lane-dense slab: pad flat x to a multiple of (8 * _LANES) so rows are
    # sublane-aligned, then view as (rows, _LANES).
    flat = x.reshape(-1).astype(jnp.float32)
    pad_to = 8 * _LANES
    n_pad = ((n + pad_to - 1) // pad_to) * pad_to
    flat = jnp.pad(flat, (0, n_pad - n))
    rows = n_pad // _LANES
    slab = flat.reshape(rows, _LANES)

    tile_r = min(_TILE_ROWS, rows)  # rows is a multiple of 8, so tile_r is too
    grid = (pl.cdiv(rows, tile_r),)

    out = pl.pallas_call(
        _linreg_kernel,
        out_shape=jax.ShapeDtypeStruct((rows, _LANES), jnp.float32),
        grid=grid,
        in_specs=[
            pl.BlockSpec(memory_space=pltpu.MemorySpace.SMEM),     # packed [w, b]
            pl.BlockSpec((tile_r, _LANES), lambda i: (i, 0)),      # x slab tile
        ],
        out_specs=pl.BlockSpec((tile_r, _LANES), lambda i: (i, 0)),
        input_output_aliases={1: 0},  # elementwise: reuse the slab's HBM buffer
        compiler_params=pltpu.CompilerParams(
            dimension_semantics=("parallel",),   # v7x: shard grid over both TCs
            vmem_limit_bytes=64 * 1024 * 1024,
        ),
    )(wb, slab)

    # Strip padding and restore the module's (N, 1) output layout.
    return out.reshape(-1)[:n].reshape(n, 1)


if __name__ == "__main__":
    key = jax.random.PRNGKey(0)
    kx, kw, kb = jax.random.split(key, 3)

    # Synthetic stand-in for the normalized cocoa_percent column (dataset-sized).
    N = 2500
    raw_x = jax.random.normal(kx, (N,), dtype=jnp.float32) * 10.0 + 70.0
    mean_x = jnp.mean(raw_x)
    std_x = jnp.std(raw_x, ddof=1)  # torch.std uses Bessel's correction
    norm_x = (raw_x - mean_x) / std_x
    x = norm_x.reshape(-1, 1)

    # Deterministic nn.Linear(1, 1) init: uniform(-1/sqrt(fan_in), 1/sqrt(fan_in)), fan_in=1.
    weight = jax.random.uniform(kw, (1, 1), dtype=jnp.float32, minval=-1.0, maxval=1.0)
    bias = jax.random.uniform(kb, (1,), dtype=jnp.float32, minval=-1.0, maxval=1.0)

    # Kernel path (large N -> lane-dense tiled pallas_call).
    y = linear_regression(x, weight, bias)
    jax.block_until_ready(y)

    y_ref = x @ weight.T + bias
    assert y.shape == (N, 1) and y.dtype == jnp.float32
    assert jnp.allclose(y, y_ref, atol=1e-6, rtol=1e-6)

    # Tiny-N fast path (plain jnp dispatch).
    y_small = linear_regression(x[:8], weight, bias)
    jax.block_until_ready(y_small)
    assert jnp.allclose(y_small, x[:8] @ weight.T + bias, atol=1e-6, rtol=1e-6)

    print("KERNEL_OK")
</pallas_src>

<mosaic_0001>
module attributes {stable_mosaic.version = 11 : i64} {
  func.func @_linreg_kernel(%arg0: i32, %arg1: memref<2xf32, #tpu.memory_space<smem>>, %arg2: memref<8x512xf32, #tpu.memory_space<vmem>>, %arg3: memref<8x512xf32, #tpu.memory_space<vmem>>) attributes {dimension_semantics = [#tpu.dimension_semantics<parallel>], iteration_bounds = array<i64: 1>, scalar_prefetch = 0 : i64, scratch_operands = 0 : i64, tpu.core_type = #tpu.core_type<tc>, window_params = [{transform_indices = @transform_0, window_bounds = array<i64: 2>}, {transform_indices = @transform_1, window_bounds = array<i64: 8, 512>}, {transform_indices = @transform_2, window_bounds = array<i64: 8, 512>}]} {
    %c0 = arith.constant 0 : index
    %0 = memref.load %arg1[%c0] : memref<2xf32, #tpu.memory_space<smem>>
    %c1 = arith.constant 1 : index
    %1 = memref.load %arg1[%c1] : memref<2xf32, #tpu.memory_space<smem>>
    %c0_0 = arith.constant 0 : index
    %c0_1 = arith.constant 0 : index
    %2 = vector.load %arg2[%c0_0, %c0_1] : memref<8x512xf32, #tpu.memory_space<vmem>>, vector<8x512xf32>
    %3 = vector.broadcast %0 : f32 to vector<8x512xf32>
    %4 = arith.mulf %2, %3 : vector<8x512xf32>
    %5 = vector.broadcast %1 : f32 to vector<8x512xf32>
    %6 = arith.addf %4, %5 : vector<8x512xf32>
    %c0_2 = arith.constant 0 : index
    %c0_3 = arith.constant 0 : index
    %7 = vector.load %arg3[%c0_2, %c0_3] : memref<8x512xf32, #tpu.memory_space<vmem>>, vector<8x512xf32>
    tpu.vector_store %arg3[%c0_2, %c0_3], %6 {strides = array<i32>} : memref<8x512xf32, #tpu.memory_space<vmem>>, vector<8x512xf32>,
    return
  }
  func.func @transform_0(%arg0: i32) -> i32 {
    %c0_i32 = arith.constant 0 : i32
    %c0_i32_0 = arith.constant 0 : i32
    return %c0_i32 : i32
  }
  func.func @transform_1(%arg0: i32) -> (i32, i32) {
    %c0_i32 = arith.constant 0 : i32
    %c0_i32_0 = arith.constant 0 : i32
    return %arg0, %c0_i32 : i32, i32
  }
  func.func @transform_2(%arg0: i32) -> (i32, i32) {
    %c0_i32 = arith.constant 0 : i32
    %c0_i32_0 = arith.constant 0 : i32
    return %arg0, %c0_i32 : i32, i32
  }
}

</mosaic_0001>

<llo_original>
// kernel: tpu_custom_call.1
$region0: #{tpu_custom_call.1}
  #allocation0 [shape = 'u32[]', space=smem, size = 0x4, offset = 0x4, fixed_abs, tag = 'smem constant byte address 0x4 - core index']
  #allocation1 [shape = 'u32[72,128]{1,0:T(1,128)}', space=vmem, size = 0x9000, scoped, tag = 'internal scratch']
  %s0 = inlined_call_operand.vmem [shape: f32[2], index: 0, kind: input, shape index: {}]
  %s1 = inlined_call_operand.hbm [shape: f32[8,512], index: 1, kind: input, shape index: {}, may-alias: {1,2}]
  %s2 = inlined_call_operand.hbm [shape: f32[8,512], index: 2, kind: output, shape index: {}, may-alias: {1,2}]
  %s3 = sld [smem:[#allocation0]]
  $region26: #{tpu_custom_call.1} parent=0
    _
  %s5 = ssub.s32 1, %s3
  %s6 = scalar_select 0, %s5, %s3
  $region1: #{tpu_custom_call.1} parent=0
    #allocation2 [shape = 'u8[512]{0}', space=smem, size = 0x200, scoped, tag = 'input window, operand 0, single buffered']
    #allocation3 [shape = 's32[1]{0}', space=sflag, size = 0x4, scoped, tag = 'scoped memory for tpu_custom_call.1']
    #allocation4 [shape = 's32[1]{0}', space=sflag, size = 0x4, scoped, tag = 'scoped memory for tpu_custom_call.1']
    #allocation5 [shape = 's32[1]{0}', space=sflag, size = 0x4, scoped, tag = 'scoped memory for tpu_custom_call.1']
    #allocation6 [shape = 'u8[16384]{0}', space=vmem, size = 0x4000, scoped, tag = 'input window, operand 1, single buffered']
    #allocation7 [shape = 'u8[16384]{0}', space=vmem, size = 0x4000, scoped, tag = 'output window, operand 0, single buffered']
    %7 = vsyncpa [#allocation5], 0
    %8 = vsyncpa [#allocation3], 0
    %9 = vsyncpa [#allocation4], 0
    // Predicated region
    $region2: #{tpu_custom_call.1} parent=1 // pred_check
      _
    $region3: #{tpu_custom_call.1} parent=1 // pred_check_branch
      %11 = sbr.rel (0) target = $region5
    $region4: #{tpu_custom_call.1} parent=1 // pred_region
      %13 = vsyncadd [#allocation5], 0
      %s15 = sshll.u32 %s0, 4
      %s16 = int_to_ptr.vmem [resolvable:$true] %s15
      %18 = dma.vmem_to_smem %s16, 16, [#allocation2], [#allocation5]
    $region5: #{tpu_custom_call.1} parent=1 // pred_fallthru
      _
    // Predicated region
    $region6: #{tpu_custom_call.1} parent=1 // pred_check
      _
    $region7: #{tpu_custom_call.1} parent=1 // pred_check_branch
      %20 = sbr.rel (0) target = $region9
    $region8: #{tpu_custom_call.1} parent=1 // pred_region
      %22 = vsyncadd [#allocation3], 0
      %s24 = sshll.u32 %s1, 4
      %s25 = int_to_ptr.hbm [resolvable:$true] %s24
      %s26 = sshll.u32 [#allocation6], 4
      %s27 = int_to_ptr.vmem [resolvable:$true] %s26
      %29 = dma.hbm_to_vmem [thread:$0]  %s25, 512, %s27, [#allocation3]
    $region9: #{tpu_custom_call.1} parent=1 // pred_fallthru
      _
    // Predicated region
    $region10: #{tpu_custom_call.1} parent=1 // pred_check
      _
    $region11: #{tpu_custom_call.1} parent=1 // pred_check_branch
      %31 = sbr.rel (0) target = $region13
    $region12: #{tpu_custom_call.1} parent=1 // pred_region
      %33 = dma.done [#allocation5], 16
    $region13: #{tpu_custom_call.1} parent=1 // pred_fallthru
      _
    // Predicated region
    $region14: #{tpu_custom_call.1} parent=1 // pred_check
      _
    $region15: #{tpu_custom_call.1} parent=1 // pred_check_branch
      %35 = sbr.rel (0) target = $region17
    $region16: #{tpu_custom_call.1} parent=1 // pred_region
      %37 = dma.done [#allocation3], 512
    $region17: #{tpu_custom_call.1} parent=1 // pred_fallthru
      _
    %38 = sfence
    %s39 = sld [smem:[#allocation2]]
    %s40 = sld [smem:[#allocation2 + $0x1]]
    %v41 = vld [vmem:[#allocation6] sm:$0xff]
    %v42 = vld [vmem:[#allocation6 + $0x8] sm:$0xff]
    %v43 = vld [vmem:[#allocation6 + $0x10] sm:$0xff]
    %v44 = vld [vmem:[#allocation6 + $0x18] sm:$0xff]
    %v45 = vstv %s39
    %v46 = vmul.f32 %v41, %v45
    %v47 = vmul.f32 %v42, %v45
    %v48 = vmul.f32 %v43, %v45
    %v49 = vmul.f32 %v44, %v45
    %v50 = vstv %s40
    %v51 = vadd.f32 %v46, %v50
    %v52 = vadd.f32 %v47, %v50
    %v53 = vadd.f32 %v48, %v50
    %v54 = vadd.f32 %v49, %v50
    %55 = vst [vmem:[#allocation7] sm:$0xff] %v51
    %56 = vst [vmem:[#allocation7 + $0x8] sm:$0xff] %v52
    %57 = vst [vmem:[#allocation7 + $0x10] sm:$0xff] %v53
    %58 = vst [vmem:[#allocation7 + $0x18] sm:$0xff] %v54
    // Predicated region
    $region18: #{tpu_custom_call.1} parent=1 // pred_check
      _
    $region19: #{tpu_custom_call.1} parent=1 // pred_check_branch
      %60 = sbr.rel (0) target = $region21
    $region20: #{tpu_custom_call.1} parent=1 // pred_region
      %62 = vsyncadd [#allocation4], 0
      %s64 = sshll.u32 [#allocation7], 4
      %s65 = int_to_ptr.vmem [resolvable:$true] %s64
      %s66 = sshll.u32 %s2, 4
      %s67 = int_to_ptr.hbm [resolvable:$true] %s66
      %69 = dma.vmem_to_hbm [thread:$0]  %s65, 512, %s67, [#allocation4]
    $region21: #{tpu_custom_call.1} parent=1 // pred_fallthru
      _
    // Predicated region
    $region22: #{tpu_custom_call.1} parent=1 // pred_check
      _
    $region23: #{tpu_custom_call.1} parent=1 // pred_check_branch
      %71 = sbr.rel (0) target = $region25
    $region24: #{tpu_custom_call.1} parent=1 // pred_region
      %73 = dma.done [#allocation4], 512
    $region25: #{tpu_custom_call.1} parent=1 // pred_fallthru
      _
    %74 = vsyncpa [#allocation3], 1
    %75 = vsyncpa [#allocation4], 1
    %76 = vsyncpa [#allocation5], 1

</llo_original>
